<compile_context>
chip_gen: v7x
topology: tpu7x:2x2x1
jax: 0.10.0
libtpu: 0.0.40
codegen_flags: <defaults>
</compile_context>

<pallas_src>
import functools

import jax
import jax.numpy as jnp
from jax.experimental import pallas as pl
from jax.experimental.pallas import tpu as pltpu


def _linear_kernel(x_ref, wt_ref, b_ref, o_ref):
    """Single-step y = x @ Wt + b (f32 MXU accumulation, f32 bias add)."""
    o_ref[...] = (
        jnp.dot(x_ref[...], wt_ref[...], preferred_element_type=jnp.float32)
        + b_ref[...]
    ).astype(o_ref.dtype)


def prepare_classifier_params(weight, bias):
    """One-time, host-side parameter prep (outside jit).

    weight: (N, K) float32 (PyTorch nn.Linear convention)
    bias:   (N,)   float32
    Returns (wt_pad, bias_pad) with
      wt_pad:   (K, N_pad) bfloat16   — pre-transposed, zero-padded to a
                                        multiple of 128 output lanes
      bias_pad: (1, N_pad) float32    — zero-padded, broadcastable row
    """
    N, K = weight.shape
    n_pad = ((N + 127) // 128) * 128

    wt_pad = jnp.zeros((K, n_pad), dtype=jnp.bfloat16)
    wt_pad = wt_pad.at[:, :N].set(weight.T.astype(jnp.bfloat16))

    bias_pad = jnp.zeros((1, n_pad), dtype=jnp.float32)
    bias_pad = bias_pad.at[:, :N].set(bias.astype(jnp.float32))
    return wt_pad, bias_pad


@functools.partial(jax.jit, static_argnames=("num_classes",))
def classifier_forward(x, wt_pad, bias_pad, *, num_classes):
    """y = x @ weight.T + bias via a single-step Pallas TPU kernel.

    x:        (B, K)      float32 (cast to bf16 for the MXU)
    wt_pad:   (K, N_pad)  bfloat16, from prepare_classifier_params
    bias_pad: (1, N_pad)  float32,  from prepare_classifier_params
    Returns (B, num_classes) float32.
    """
    B, K = x.shape
    K2, n_pad = wt_pad.shape
    assert K == K2, "feature dims must match"

    x_bf16 = x.astype(jnp.bfloat16)

    y_pad = pl.pallas_call(
        _linear_kernel,
        out_shape=jax.ShapeDtypeStruct((B, n_pad), jnp.float32),
        grid_spec=pltpu.PrefetchScalarGridSpec(
            num_scalar_prefetch=0,
            grid=(1,),
            in_specs=[
                pl.BlockSpec((B, K), lambda i: (0, 0)),       # x, full block
                pl.BlockSpec((K, n_pad), lambda i: (0, 0)),   # W^T, full block
                pl.BlockSpec((1, n_pad), lambda i: (0, 0)),   # bias row
            ],
            out_specs=pl.BlockSpec((B, n_pad), lambda i: (0, 0)),
        ),
        compiler_params=pltpu.CompilerParams(
            dimension_semantics=("arbitrary",),
        ),
    )(x_bf16, wt_pad, bias_pad)

    return y_pad[:, :num_classes]


if __name__ == "__main__":
    # Module-consistent small shapes: EfficientNet-B4 pooled feature dim is
    # 1792 (lane-aligned); small batch and a 10-class head.
    B = 2
    IN_FEATURES = 1792
    NUM_CLASSES = 10

    key = jax.random.PRNGKey(0)
    kx, kw, kb = jax.random.split(key, 3)

    x = jax.random.normal(kx, (B, IN_FEATURES), dtype=jnp.float32)
    # Deterministic synthetic nn.Linear parameters (PyTorch shape conventions).
    weight = jax.random.normal(kw, (NUM_CLASSES, IN_FEATURES), dtype=jnp.float32) * 0.02
    bias = jax.random.normal(kb, (NUM_CLASSES,), dtype=jnp.float32) * 0.01

    # One-time parameter preparation (transpose + lane padding + bf16 cast).
    wt_pad, bias_pad = prepare_classifier_params(weight, bias)

    y = classifier_forward(x, wt_pad, bias_pad, num_classes=NUM_CLASSES)
    jax.block_until_ready(y)
    assert y.shape == (B, NUM_CLASSES)

    # Reference with the same bf16 inputs / f32 accumulation (tight tolerance).
    y_ref_bf16 = (
        jnp.dot(
            x.astype(jnp.bfloat16),
            weight.T.astype(jnp.bfloat16),
            preferred_element_type=jnp.float32,
        )
        + bias
    )
    assert jnp.allclose(y, y_ref_bf16, atol=1e-3, rtol=1e-3), "mismatch vs bf16 reference"

    # Full-precision PyTorch-semantics reference (loose tolerance for bf16 inputs).
    y_ref_f32 = x @ weight.T + bias
    assert jnp.allclose(y, y_ref_f32, atol=5e-2, rtol=5e-2), "mismatch vs f32 reference"

    print("KERNEL_OK")
</pallas_src>

<mosaic_0001>
module attributes {stable_mosaic.version = 11 : i64} {
  func.func @_linear_kernel(%arg0: i32, %arg1: memref<2x1792xbf16, #tpu.memory_space<vmem>>, %arg2: memref<1792x128xbf16, #tpu.memory_space<vmem>>, %arg3: memref<1x128xf32, #tpu.memory_space<vmem>>, %arg4: memref<2x128xf32, #tpu.memory_space<vmem>>) attributes {dimension_semantics = [#tpu.dimension_semantics<arbitrary>], iteration_bounds = array<i64: 1>, scalar_prefetch = 0 : i64, scratch_operands = 0 : i64, tpu.core_type = #tpu.core_type<tc>, window_params = [{pipeline_mode = #tpu.pipeline_mode<synchronous>, transform_indices = @transform_0, window_bounds = array<i64: 2, 1792>}, {pipeline_mode = #tpu.pipeline_mode<synchronous>, transform_indices = @transform_1, window_bounds = array<i64: 1792, 128>}, {pipeline_mode = #tpu.pipeline_mode<synchronous>, transform_indices = @transform_2, window_bounds = array<i64: 1, 128>}, {pipeline_mode = #tpu.pipeline_mode<synchronous>, transform_indices = @transform_3, window_bounds = array<i64: 2, 128>}]} {
    %c0 = arith.constant 0 : index
    %c0_0 = arith.constant 0 : index
    %0 = vector.load %arg1[%c0, %c0_0] : memref<2x1792xbf16, #tpu.memory_space<vmem>>, vector<2x1792xbf16>
    %c0_1 = arith.constant 0 : index
    %c0_2 = arith.constant 0 : index
    %1 = vector.load %arg2[%c0_1, %c0_2] : memref<1792x128xbf16, #tpu.memory_space<vmem>>, vector<1792x128xbf16>
    %cst = arith.constant dense<0.000000e+00> : vector<2x128xf32>
    %2 = tpu.matmul %0, %1, %cst {dimension_numbers = #tpu.dot_dimension_numbers<[1], [0], [0], [1], [0, 0, 1, 1], [], []>} : vector<2x1792xbf16>, vector<1792x128xbf16>, vector<2x128xf32> -> vector<2x128xf32>
    %c0_3 = arith.constant 0 : index
    %c0_4 = arith.constant 0 : index
    %3 = vector.load %arg3[%c0_3, %c0_4] : memref<1x128xf32, #tpu.memory_space<vmem>>, vector<1x128xf32>
    %4 = vector.broadcast %3 : vector<1x128xf32> to vector<2x128xf32>
    %5 = arith.addf %2, %4 : vector<2x128xf32>
    %c0_5 = arith.constant 0 : index
    %c0_6 = arith.constant 0 : index
    %6 = vector.load %arg4[%c0_5, %c0_6] : memref<2x128xf32, #tpu.memory_space<vmem>>, vector<2x128xf32>
    tpu.vector_store %arg4[%c0_5, %c0_6], %5 {strides = array<i32>} : memref<2x128xf32, #tpu.memory_space<vmem>>, vector<2x128xf32>,
    return
  }
  func.func @transform_0(%arg0: i32) -> (i32, i32) {
    %c0_i32 = arith.constant 0 : i32
    %c0_i32_0 = arith.constant 0 : i32
    %c0_i32_1 = arith.constant 0 : i32
    return %c0_i32, %c0_i32_0 : i32, i32
  }
  func.func @transform_1(%arg0: i32) -> (i32, i32) {
    %c0_i32 = arith.constant 0 : i32
    %c0_i32_0 = arith.constant 0 : i32
    %c0_i32_1 = arith.constant 0 : i32
    return %c0_i32, %c0_i32_0 : i32, i32
  }
  func.func @transform_2(%arg0: i32) -> (i32, i32) {
    %c0_i32 = arith.constant 0 : i32
    %c0_i32_0 = arith.constant 0 : i32
    %c0_i32_1 = arith.constant 0 : i32
    return %c0_i32, %c0_i32_0 : i32, i32
  }
  func.func @transform_3(%arg0: i32) -> (i32, i32) {
    %c0_i32 = arith.constant 0 : i32
    %c0_i32_0 = arith.constant 0 : i32
    %c0_i32_1 = arith.constant 0 : i32
    return %c0_i32, %c0_i32_0 : i32, i32
  }
}

</mosaic_0001>

<llo_original>
// kernel: classifier_forward.1
$region0: #{classifier_forward.1}
  #allocation0 [shape = 'u32[]', space=smem, size = 0x4, offset = 0x4, fixed_abs, tag = 'smem constant byte address 0x4 - core index']
  #allocation1 [shape = 'u32[144,128]{1,0:T(1,128)}', space=vmem, size = 0x12000, scoped, tag = 'internal scratch']
  %s0 = inlined_call_operand.vmem [shape: bf16[2,1792], index: 0, kind: input, shape index: {}]
  %s1 = inlined_call_operand.hbm [shape: bf16[1792,128], index: 1, kind: input, shape index: {}]
  %s2 = inlined_call_operand.vmem [shape: f32[1,128], index: 2, kind: input, shape index: {}]
  %s3 = inlined_call_operand.hbm [shape: f32[2,128], index: 3, kind: output, shape index: {}]
  %s4 = sld [smem:[#allocation0]]
  $region26: #{classifier_forward.1} parent=0
    _
  %s6 = ssub.s32 1, %s4
  %s7 = scalar_select 0, %s6, %s4
  $region1: #{classifier_forward.1} parent=0
    #allocation2 [shape = 'u8[458752]{0}', space=vmem, size = 0x70000, scoped, tag = 'input window, operand 1, single buffered']
    #allocation3 [shape = 's32[1]{0}', space=sflag, size = 0x4, scoped, tag = 'scoped memory for classifier_forward.1']
    #allocation4 [shape = 's32[1]{0}', space=sflag, size = 0x4, scoped, tag = 'scoped memory for classifier_forward.1']
    #allocation5 [shape = 'u8[1024]{0}', space=vmem, size = 0x400, scoped, tag = 'output window, operand 0, single buffered']
    %8 = vsyncpa [#allocation3], 0
    %9 = vsyncpa [#allocation4], 0
    // Predicated region
    $region2: #{classifier_forward.1} parent=1 // pred_check
      _
    $region3: #{classifier_forward.1} parent=1 // pred_check_branch
      %11 = sbr.rel (0) target = $region5
    $region4: #{classifier_forward.1} parent=1 // pred_region
      _
    $region5: #{classifier_forward.1} parent=1 // pred_fallthru
      _
    // Predicated region
    $region6: #{classifier_forward.1} parent=1 // pred_check
      _
    $region7: #{classifier_forward.1} parent=1 // pred_check_branch
      %13 = sbr.rel (0) target = $region9
    $region8: #{classifier_forward.1} parent=1 // pred_region
      %s15 = ssub.s32 14336, 14336
      %16 = vsyncadd [#allocation3], %s15
      %s17 = sshll.u32 [#allocation2], 4
      %s18 = int_to_ptr.vmem [resolvable:$true] %s17
      %23 = dma.hbm_to_vmem [thread:$0]  %s1, 14336, %s18, [#allocation3], 64, 64, 4
    $region9: #{classifier_forward.1} parent=1 // pred_fallthru
      _
    // Predicated region
    $region10: #{classifier_forward.1} parent=1 // pred_check
      _
    $region11: #{classifier_forward.1} parent=1 // pred_check_branch
      %25 = sbr.rel (0) target = $region13
    $region12: #{classifier_forward.1} parent=1 // pred_region
      _
    $region13: #{classifier_forward.1} parent=1 // pred_fallthru
      _
    // Predicated region
    $region14: #{classifier_forward.1} parent=1 // pred_check
      _
    $region15: #{classifier_forward.1} parent=1 // pred_check_branch
      %27 = sbr.rel (0) target = $region17
    $region16: #{classifier_forward.1} parent=1 // pred_region
      %28 = dma.done [#allocation3], 14336
    $region17: #{classifier_forward.1} parent=1 // pred_fallthru
      _
    %v30 = vld [vmem:[%s0] sm:$0xff]
    %v31 = vld [vmem:[%s0 + $0x8] sm:$0x3f]
    %v32 = vld [vmem:[#allocation2] sm:$0xf]
    %v33 = vld [vmem:[#allocation2 + $0x4] sm:$0xf]
    %v34 = vld [vmem:[#allocation2 + $0x8] sm:$0xf]
    %v35 = vld [vmem:[#allocation2 + $0xc] sm:$0xf]
    %v36 = vld [vmem:[#allocation2 + $0x10] sm:$0xf]
    %v37 = vld [vmem:[#allocation2 + $0x14] sm:$0xf]
    %v38 = vld [vmem:[#allocation2 + $0x18] sm:$0xf]
    %v39 = vld [vmem:[#allocation2 + $0x1c] sm:$0xf]
    %v40 = vld [vmem:[#allocation2 + $0x20] sm:$0xf]
    %v41 = vld [vmem:[#allocation2 + $0x24] sm:$0xf]
    %v42 = vld [vmem:[#allocation2 + $0x28] sm:$0xf]
    %v43 = vld [vmem:[#allocation2 + $0x2c] sm:$0xf]
    %v44 = vld [vmem:[#allocation2 + $0x30] sm:$0xf]
    %v45 = vld [vmem:[#allocation2 + $0x34] sm:$0xf]
    %v46 = vld [vmem:[#allocation2 + $0x38] sm:$0xf]
    %v47 = vld [vmem:[#allocation2 + $0x3c] sm:$0xf]
    %v48 = vld [vmem:[#allocation2 + $0x40] sm:$0xf]
    %v49 = vld [vmem:[#allocation2 + $0x44] sm:$0xf]
    %v50 = vld [vmem:[#allocation2 + $0x48] sm:$0xf]
    %v51 = vld [vmem:[#allocation2 + $0x4c] sm:$0xf]
    %v52 = vld [vmem:[#allocation2 + $0x50] sm:$0xf]
    %v53 = vld [vmem:[#allocation2 + $0x54] sm:$0xf]
    %v54 = vld [vmem:[#allocation2 + $0x58] sm:$0xf]
    %v55 = vld [vmem:[#allocation2 + $0x5c] sm:$0xf]
    %v56 = vld [vmem:[#allocation2 + $0x60] sm:$0xf]
    %v57 = vld [vmem:[#allocation2 + $0x64] sm:$0xf]
    %v58 = vld [vmem:[#allocation2 + $0x68] sm:$0xf]
    %v59 = vld [vmem:[#allocation2 + $0x6c] sm:$0xf]
    %v60 = vld [vmem:[#allocation2 + $0x70] sm:$0xf]
    %v61 = vld [vmem:[#allocation2 + $0x74] sm:$0xf]
    %v62 = vld [vmem:[#allocation2 + $0x78] sm:$0xf]
    %v63 = vld [vmem:[#allocation2 + $0x7c] sm:$0xf]
    %v64 = vld [vmem:[#allocation2 + $0x80] sm:$0xf]
    %v65 = vld [vmem:[#allocation2 + $0x84] sm:$0xf]
    %v66 = vld [vmem:[#allocation2 + $0x88] sm:$0xf]
    %v67 = vld [vmem:[#allocation2 + $0x8c] sm:$0xf]
    %v68 = vld [vmem:[#allocation2 + $0x90] sm:$0xf]
    %v69 = vld [vmem:[#allocation2 + $0x94] sm:$0xf]
    %v70 = vld [vmem:[#allocation2 + $0x98] sm:$0xf]
    %v71 = vld [vmem:[#allocation2 + $0x9c] sm:$0xf]
    %v72 = vld [vmem:[#allocation2 + $0xa0] sm:$0xf]
    %v73 = vld [vmem:[#allocation2 + $0xa4] sm:$0xf]
    %v74 = vld [vmem:[#allocation2 + $0xa8] sm:$0xf]
    %v75 = vld [vmem:[#allocation2 + $0xac] sm:$0xf]
    %v76 = vld [vmem:[#allocation2 + $0xb0] sm:$0xf]
    %v77 = vld [vmem:[#allocation2 + $0xb4] sm:$0xf]
    %v78 = vld [vmem:[#allocation2 + $0xb8] sm:$0xf]
    %v79 = vld [vmem:[#allocation2 + $0xbc] sm:$0xf]
    %v80 = vld [vmem:[#allocation2 + $0xc0] sm:$0xf]
    %v81 = vld [vmem:[#allocation2 + $0xc4] sm:$0xf]
    %v82 = vld [vmem:[#allocation2 + $0xc8] sm:$0xf]
    %v83 = vld [vmem:[#allocation2 + $0xcc] sm:$0xf]
    %v84 = vld [vmem:[#allocation2 + $0xd0] sm:$0xf]
    %v85 = vld [vmem:[#allocation2 + $0xd4] sm:$0xf]
    %v86 = vld [vmem:[#allocation2 + $0xd8] sm:$0xf]
    %v87 = vld [vmem:[#allocation2 + $0xdc] sm:$0xf]
    %v88 = vld [vmem:[#allocation2 + $0xe0] sm:$0xf]
    %v89 = vld [vmem:[#allocation2 + $0xe4] sm:$0xf]
    %v90 = vld [vmem:[#allocation2 + $0xe8] sm:$0xf]
    %v91 = vld [vmem:[#allocation2 + $0xec] sm:$0xf]
    %v92 = vld [vmem:[#allocation2 + $0xf0] sm:$0xf]
    %v93 = vld [vmem:[#allocation2 + $0xf4] sm:$0xf]
    %v94 = vld [vmem:[#allocation2 + $0xf8] sm:$0xf]
    %v95 = vld [vmem:[#allocation2 + $0xfc] sm:$0xf]
    %v96 = vld [vmem:[#allocation2 + $0x100] sm:$0xf]
    %v97 = vld [vmem:[#allocation2 + $0x104] sm:$0xf]
    %v98 = vld [vmem:[#allocation2 + $0x108] sm:$0xf]
    %v99 = vld [vmem:[#allocation2 + $0x10c] sm:$0xf]
    %v100 = vld [vmem:[#allocation2 + $0x110] sm:$0xf]
    %v101 = vld [vmem:[#allocation2 + $0x114] sm:$0xf]
    %v102 = vld [vmem:[#allocation2 + $0x118] sm:$0xf]
    %v103 = vld [vmem:[#allocation2 + $0x11c] sm:$0xf]
    %v104 = vld [vmem:[#allocation2 + $0x120] sm:$0xf]
    %v105 = vld [vmem:[#allocation2 + $0x124] sm:$0xf]
    %v106 = vld [vmem:[#allocation2 + $0x128] sm:$0xf]
    %v107 = vld [vmem:[#allocation2 + $0x12c] sm:$0xf]
    %v108 = vld [vmem:[#allocation2 + $0x130] sm:$0xf]
    %v109 = vld [vmem:[#allocation2 + $0x134] sm:$0xf]
    %v110 = vld [vmem:[#allocation2 + $0x138] sm:$0xf]
    %v111 = vld [vmem:[#allocation2 + $0x13c] sm:$0xf]
    %v112 = vld [vmem:[#allocation2 + $0x140] sm:$0xf]
    %v113 = vld [vmem:[#allocation2 + $0x144] sm:$0xf]
    %v114 = vld [vmem:[#allocation2 + $0x148] sm:$0xf]
    %v115 = vld [vmem:[#allocation2 + $0x14c] sm:$0xf]
    %v116 = vld [vmem:[#allocation2 + $0x150] sm:$0xf]
    %v117 = vld [vmem:[#allocation2 + $0x154] sm:$0xf]
    %v118 = vld [vmem:[#allocation2 + $0x158] sm:$0xf]
    %v119 = vld [vmem:[#allocation2 + $0x15c] sm:$0xf]
    %v120 = vld [vmem:[#allocation2 + $0x160] sm:$0xf]
    %v121 = vld [vmem:[#allocation2 + $0x164] sm:$0xf]
    %v122 = vld [vmem:[#allocation2 + $0x168] sm:$0xf]
    %v123 = vld [vmem:[#allocation2 + $0x16c] sm:$0xf]
    %v124 = vld [vmem:[#allocation2 + $0x170] sm:$0xf]
    %v125 = vld [vmem:[#allocation2 + $0x174] sm:$0xf]
    %v126 = vld [vmem:[#allocation2 + $0x178] sm:$0xf]
    %v127 = vld [vmem:[#allocation2 + $0x17c] sm:$0xf]
    %v128 = vld [vmem:[#allocation2 + $0x180] sm:$0xf]
    %v129 = vld [vmem:[#allocation2 + $0x184] sm:$0xf]
    %v130 = vld [vmem:[#allocation2 + $0x188] sm:$0xf]
    %v131 = vld [vmem:[#allocation2 + $0x18c] sm:$0xf]
    %v132 = vld [vmem:[#allocation2 + $0x190] sm:$0xf]
    %v133 = vld [vmem:[#allocation2 + $0x194] sm:$0xf]
    %v134 = vld [vmem:[#allocation2 + $0x198] sm:$0xf]
    %v135 = vld [vmem:[#allocation2 + $0x19c] sm:$0xf]
    %v136 = vld [vmem:[#allocation2 + $0x1a0] sm:$0xf]
    %v137 = vld [vmem:[#allocation2 + $0x1a4] sm:$0xf]
    %v138 = vld [vmem:[#allocation2 + $0x1a8] sm:$0xf]
    %v139 = vld [vmem:[#allocation2 + $0x1ac] sm:$0xf]
    %v140 = vld [vmem:[#allocation2 + $0x1b0] sm:$0xf]
    %v141 = vld [vmem:[#allocation2 + $0x1b4] sm:$0xf]
    %v142 = vld [vmem:[#allocation2 + $0x1b8] sm:$0xf]
    %v143 = vld [vmem:[#allocation2 + $0x1bc] sm:$0xf]
    %v144 = vld [vmem:[#allocation2 + $0x1c0] sm:$0xf]
    %v145 = vld [vmem:[#allocation2 + $0x1c4] sm:$0xf]
    %v146 = vld [vmem:[#allocation2 + $0x1c8] sm:$0xf]
    %v147 = vld [vmem:[#allocation2 + $0x1cc] sm:$0xf]
    %v148 = vld [vmem:[#allocation2 + $0x1d0] sm:$0xf]
    %v149 = vld [vmem:[#allocation2 + $0x1d4] sm:$0xf]
    %v150 = vld [vmem:[#allocation2 + $0x1d8] sm:$0xf]
    %v151 = vld [vmem:[#allocation2 + $0x1dc] sm:$0xf]
    %v152 = vld [vmem:[#allocation2 + $0x1e0] sm:$0xf]
    %v153 = vld [vmem:[#allocation2 + $0x1e4] sm:$0xf]
    %v154 = vld [vmem:[#allocation2 + $0x1e8] sm:$0xf]
    %v155 = vld [vmem:[#allocation2 + $0x1ec] sm:$0xf]
    %v156 = vld [vmem:[#allocation2 + $0x1f0] sm:$0xf]
    %v157 = vld [vmem:[#allocation2 + $0x1f4] sm:$0xf]
    %v158 = vld [vmem:[#allocation2 + $0x1f8] sm:$0xf]
    %v159 = vld [vmem:[#allocation2 + $0x1fc] sm:$0xf]
    %v160 = vld [vmem:[#allocation2 + $0x200] sm:$0xf]
    %v161 = vld [vmem:[#allocation2 + $0x204] sm:$0xf]
    %v162 = vld [vmem:[#allocation2 + $0x208] sm:$0xf]
    %v163 = vld [vmem:[#allocation2 + $0x20c] sm:$0xf]
    %v164 = vld [vmem:[#allocation2 + $0x210] sm:$0xf]
    %v165 = vld [vmem:[#allocation2 + $0x214] sm:$0xf]
    %v166 = vld [vmem:[#allocation2 + $0x218] sm:$0xf]
    %v167 = vld [vmem:[#allocation2 + $0x21c] sm:$0xf]
    %v168 = vld [vmem:[#allocation2 + $0x220] sm:$0xf]
    %v169 = vld [vmem:[#allocation2 + $0x224] sm:$0xf]
    %v170 = vld [vmem:[#allocation2 + $0x228] sm:$0xf]
    %v171 = vld [vmem:[#allocation2 + $0x22c] sm:$0xf]
    %v172 = vld [vmem:[#allocation2 + $0x230] sm:$0xf]
    %v173 = vld [vmem:[#allocation2 + $0x234] sm:$0xf]
    %v174 = vld [vmem:[#allocation2 + $0x238] sm:$0xf]
    %v175 = vld [vmem:[#allocation2 + $0x23c] sm:$0xf]
    %v176 = vld [vmem:[#allocation2 + $0x240] sm:$0xf]
    %v177 = vld [vmem:[#allocation2 + $0x244] sm:$0xf]
    %v178 = vld [vmem:[#allocation2 + $0x248] sm:$0xf]
    %v179 = vld [vmem:[#allocation2 + $0x24c] sm:$0xf]
    %v180 = vld [vmem:[#allocation2 + $0x250] sm:$0xf]
    %v181 = vld [vmem:[#allocation2 + $0x254] sm:$0xf]
    %v182 = vld [vmem:[#allocation2 + $0x258] sm:$0xf]
    %v183 = vld [vmem:[#allocation2 + $0x25c] sm:$0xf]
    %v184 = vld [vmem:[#allocation2 + $0x260] sm:$0xf]
    %v185 = vld [vmem:[#allocation2 + $0x264] sm:$0xf]
    %v186 = vld [vmem:[#allocation2 + $0x268] sm:$0xf]
    %v187 = vld [vmem:[#allocation2 + $0x26c] sm:$0xf]
    %v188 = vld [vmem:[#allocation2 + $0x270] sm:$0xf]
    %v189 = vld [vmem:[#allocation2 + $0x274] sm:$0xf]
    %v190 = vld [vmem:[#allocation2 + $0x278] sm:$0xf]
    %v191 = vld [vmem:[#allocation2 + $0x27c] sm:$0xf]
    %v192 = vld [vmem:[#allocation2 + $0x280] sm:$0xf]
    %v193 = vld [vmem:[#allocation2 + $0x284] sm:$0xf]
    %v194 = vld [vmem:[#allocation2 + $0x288] sm:$0xf]
    %v195 = vld [vmem:[#allocation2 + $0x28c] sm:$0xf]
    %v196 = vld [vmem:[#allocation2 + $0x290] sm:$0xf]
    %v197 = vld [vmem:[#allocation2 + $0x294] sm:$0xf]
    %v198 = vld [vmem:[#allocation2 + $0x298] sm:$0xf]
    %v199 = vld [vmem:[#allocation2 + $0x29c] sm:$0xf]
    %v200 = vld [vmem:[#allocation2 + $0x2a0] sm:$0xf]
    %v201 = vld [vmem:[#allocation2 + $0x2a4] sm:$0xf]
    %v202 = vld [vmem:[#allocation2 + $0x2a8] sm:$0xf]
    %v203 = vld [vmem:[#allocation2 + $0x2ac] sm:$0xf]
    %v204 = vld [vmem:[#allocation2 + $0x2b0] sm:$0xf]
    %v205 = vld [vmem:[#allocation2 + $0x2b4] sm:$0xf]
    %v206 = vld [vmem:[#allocation2 + $0x2b8] sm:$0xf]
    %v207 = vld [vmem:[#allocation2 + $0x2bc] sm:$0xf]
    %v208 = vld [vmem:[#allocation2 + $0x2c0] sm:$0xf]
    %v209 = vld [vmem:[#allocation2 + $0x2c4] sm:$0xf]
    %v210 = vld [vmem:[#allocation2 + $0x2c8] sm:$0xf]
    %v211 = vld [vmem:[#allocation2 + $0x2cc] sm:$0xf]
    %v212 = vld [vmem:[#allocation2 + $0x2d0] sm:$0xf]
    %v213 = vld [vmem:[#allocation2 + $0x2d4] sm:$0xf]
    %v214 = vld [vmem:[#allocation2 + $0x2d8] sm:$0xf]
    %v215 = vld [vmem:[#allocation2 + $0x2dc] sm:$0xf]
    %v216 = vld [vmem:[#allocation2 + $0x2e0] sm:$0xf]
    %v217 = vld [vmem:[#allocation2 + $0x2e4] sm:$0xf]
    %v218 = vld [vmem:[#allocation2 + $0x2e8] sm:$0xf]
    %v219 = vld [vmem:[#allocation2 + $0x2ec] sm:$0xf]
    %v220 = vld [vmem:[#allocation2 + $0x2f0] sm:$0xf]
    %v221 = vld [vmem:[#allocation2 + $0x2f4] sm:$0xf]
    %v222 = vld [vmem:[#allocation2 + $0x2f8] sm:$0xf]
    %v223 = vld [vmem:[#allocation2 + $0x2fc] sm:$0xf]
    %v224 = vld [vmem:[#allocation2 + $0x300] sm:$0xf]
    %v225 = vld [vmem:[#allocation2 + $0x304] sm:$0xf]
    %v226 = vld [vmem:[#allocation2 + $0x308] sm:$0xf]
    %v227 = vld [vmem:[#allocation2 + $0x30c] sm:$0xf]
    %v228 = vld [vmem:[#allocation2 + $0x310] sm:$0xf]
    %v229 = vld [vmem:[#allocation2 + $0x314] sm:$0xf]
    %v230 = vld [vmem:[#allocation2 + $0x318] sm:$0xf]
    %v231 = vld [vmem:[#allocation2 + $0x31c] sm:$0xf]
    %v232 = vld [vmem:[#allocation2 + $0x320] sm:$0xf]
    %v233 = vld [vmem:[#allocation2 + $0x324] sm:$0xf]
    %v234 = vld [vmem:[#allocation2 + $0x328] sm:$0xf]
    %v235 = vld [vmem:[#allocation2 + $0x32c] sm:$0xf]
    %v236 = vld [vmem:[#allocation2 + $0x330] sm:$0xf]
    %v237 = vld [vmem:[#allocation2 + $0x334] sm:$0xf]
    %v238 = vld [vmem:[#allocation2 + $0x338] sm:$0xf]
    %v239 = vld [vmem:[#allocation2 + $0x33c] sm:$0xf]
    %v240 = vld [vmem:[#allocation2 + $0x340] sm:$0xf]
    %v241 = vld [vmem:[#allocation2 + $0x344] sm:$0xf]
    %v242 = vld [vmem:[#allocation2 + $0x348] sm:$0xf]
    %v243 = vld [vmem:[#allocation2 + $0x34c] sm:$0xf]
    %v244 = vld [vmem:[#allocation2 + $0x350] sm:$0xf]
    %v245 = vld [vmem:[#allocation2 + $0x354] sm:$0xf]
    %v246 = vld [vmem:[#allocation2 + $0x358] sm:$0xf]
    %v247 = vld [vmem:[#allocation2 + $0x35c] sm:$0xf]
    %v248 = vld [vmem:[#allocation2 + $0x360] sm:$0xf]
    %v249 = vld [vmem:[#allocation2 + $0x364] sm:$0xf]
    %v250 = vld [vmem:[#allocation2 + $0x368] sm:$0xf]
    %v251 = vld [vmem:[#allocation2 + $0x36c] sm:$0xf]
    %v252 = vld [vmem:[#allocation2 + $0x370] sm:$0xf]
    %v253 = vld [vmem:[#allocation2 + $0x374] sm:$0xf]
    %v254 = vld [vmem:[#allocation2 + $0x378] sm:$0xf]
    %v255 = vld [vmem:[#allocation2 + $0x37c] sm:$0xf]
    %v256 = vld [vmem:[%s2] sm:$0x1]
    %v258 = vlaneseq
    %v259 = vshrl.u32 %v258, 7
    %v260 = vsub.s32 0, %v259
    %v261 = vrot.slane %v256, %v260
    %v265 = vcombine.high %v30, %v30
    %v267 = vunpack.c.l.s4 1966171168
    %v268 = vunpack.c.0.s8 %v267
    %v269 = vlaneseq
    %v270 = vshrl.u32 %v269, 7
    %v271 = vsub.s32 %v268, %v270
    %v272 = vrot.slane %v30, %v271
    %v274 = vunpack.c.l.s4 1966171168
    %v275 = vunpack.c.0.s8 %v274
    %v276 = vlaneseq
    %v277 = vshrl.u32 %v276, 7
    %v278 = vsub.s32 %v275, %v277
    %v279 = vrot.slane %v265, %v278
    %v280 = vcombine.high %v272, %v272
    %v281 = vcombine.high %v279, %v279
    %v283 = vunpack.c.l.s4 1966171168
    %v284 = vunpack.c.0.s8 %v283
    %v285 = vlaneseq
    %v286 = vshrl.u32 %v285, 7
    %v287 = vsub.s32 %v284, %v286
    %v288 = vrot.slane %v272, %v287
    %v290 = vunpack.c.l.s4 1966171168
    %v291 = vunpack.c.0.s8 %v290
    %v292 = vlaneseq
    %v293 = vshrl.u32 %v292, 7
    %v294 = vsub.s32 %v291, %v293
    %v295 = vrot.slane %v279, %v294
    %v297 = vunpack.c.l.s4 1966171168
    %v298 = vunpack.c.0.s8 %v297
    %v299 = vlaneseq
    %v300 = vshrl.u32 %v299, 7
    %v301 = vsub.s32 %v298, %v300
    %v302 = vrot.slane %v280, %v301
    %v304 = vunpack.c.l.s4 1966171168
    %v305 = vunpack.c.0.s8 %v304
    %v306 = vlaneseq
    %v307 = vshrl.u32 %v306, 7
    %v308 = vsub.s32 %v305, %v307
    %v309 = vrot.slane %v281, %v308
    %v310 = vcombine.high %v288, %v288
    %v311 = vcombine.high %v295, %v295
    %v312 = vcombine.high %v302, %v302
    %v313 = vcombine.high %v309, %v309
    %v314 = vcombine.high %v31, %v31
    %v316 = vunpack.c.l.s4 1966171168
    %v317 = vunpack.c.0.s8 %v316
    %v318 = vlaneseq
    %v319 = vshrl.u32 %v318, 7
    %v320 = vsub.s32 %v317, %v319
    %v321 = vrot.slane %v31, %v320
    %v323 = vunpack.c.l.s4 1966171168
    %v324 = vunpack.c.0.s8 %v323
    %v325 = vlaneseq
    %v326 = vshrl.u32 %v325, 7
    %v327 = vsub.s32 %v324, %v326
    %v328 = vrot.slane %v314, %v327
    %v329 = vcombine.high %v321, %v321
    %v330 = vcombine.high %v328, %v328
    %v332 = vunpack.c.l.s4 1966171168
    %v333 = vunpack.c.0.s8 %v332
    %v334 = vlaneseq
    %v335 = vshrl.u32 %v334, 7
    %v336 = vsub.s32 %v333, %v335
    %v337 = vrot.slane %v321, %v336
    %v339 = vunpack.c.l.s4 1966171168
    %v340 = vunpack.c.0.s8 %v339
    %v341 = vlaneseq
    %v342 = vshrl.u32 %v341, 7
    %v343 = vsub.s32 %v340, %v342
    %v344 = vrot.slane %v328, %v343
    %v346 = vunpack.c.l.s4 1966171168
    %v347 = vunpack.c.0.s8 %v346
    %v348 = vlaneseq
    %v349 = vshrl.u32 %v348, 7
    %v350 = vsub.s32 %v347, %v349
    %v351 = vrot.slane %v329, %v350
    %v353 = vunpack.c.l.s4 1966171168
    %v354 = vunpack.c.0.s8 %v353
    %v355 = vlaneseq
    %v356 = vshrl.u32 %v355, 7
    %v357 = vsub.s32 %v354, %v356
    %v358 = vrot.slane %v330, %v357
    %v359 = vcombine.high %v337, %v337
    %v360 = vcombine.high %v351, %v351
    %v599 = vunpack.c.l.b16 %v32
    %v600 = vunpack.c.l.b16 %v33
    %v601 = vunpack.c.l.b16 %v34
    %v602 = vunpack.c.l.b16 %v35
    %v603 = vunpack.c.l.b16 %v36
    %v604 = vunpack.c.l.b16 %v37
    %v605 = vunpack.c.l.b16 %v38
    %v606 = vunpack.c.l.b16 %v39
    %v607 = vunpack.c.l.b16 %v40
    %v608 = vunpack.c.l.b16 %v41
    %v609 = vunpack.c.l.b16 %v42
    %v610 = vunpack.c.l.b16 %v43
    %v611 = vunpack.c.l.b16 %v44
    %v612 = vunpack.c.l.b16 %v45
    %v613 = vunpack.c.l.b16 %v46
    %v614 = vunpack.c.l.b16 %v47
    %v615 = vunpack.c.l.b16 %v48
    %v616 = vunpack.c.l.b16 %v49
    %v617 = vunpack.c.l.b16 %v50
    %v618 = vunpack.c.l.b16 %v51
    %v619 = vunpack.c.l.b16 %v52
    %v620 = vunpack.c.l.b16 %v53
    %v621 = vunpack.c.l.b16 %v54
    %v622 = vunpack.c.l.b16 %v55
    %v623 = vunpack.c.l.b16 %v56
    %v624 = vunpack.c.l.b16 %v57
    %v625 = vunpack.c.l.b16 %v58
    %v626 = vunpack.c.l.b16 %v59
    %v627 = vunpack.c.l.b16 %v60
    %v628 = vunpack.c.l.b16 %v61
    %v629 = vunpack.c.l.b16 %v62
    %v630 = vunpack.c.l.b16 %v63
    %v631 = vunpack.c.l.b16 %v64
    %v632 = vunpack.c.l.b16 %v65
    %v633 = vunpack.c.l.b16 %v66
    %v634 = vunpack.c.l.b16 %v67
    %v635 = vunpack.c.l.b16 %v68
    %v636 = vunpack.c.l.b16 %v69
    %v637 = vunpack.c.l.b16 %v70
    %v638 = vunpack.c.l.b16 %v71
    %v639 = vunpack.c.l.b16 %v72
    %v640 = vunpack.c.l.b16 %v73
    %v641 = vunpack.c.l.b16 %v74
    %v642 = vunpack.c.l.b16 %v75
    %v643 = vunpack.c.l.b16 %v76
    %v644 = vunpack.c.l.b16 %v77
    %v645 = vunpack.c.l.b16 %v78
    %v646 = vunpack.c.l.b16 %v79
    %v647 = vunpack.c.l.b16 %v80
    %v648 = vunpack.c.l.b16 %v81
    %v649 = vunpack.c.l.b16 %v82
    %v650 = vunpack.c.l.b16 %v83
    %v651 = vunpack.c.l.b16 %v84
    %v652 = vunpack.c.l.b16 %v85
    %v653 = vunpack.c.l.b16 %v86
    %v654 = vunpack.c.l.b16 %v87
    %v655 = vunpack.c.l.b16 %v88
    %v656 = vunpack.c.l.b16 %v89
    %v657 = vunpack.c.l.b16 %v90
    %v658 = vunpack.c.l.b16 %v91
    %v659 = vunpack.c.l.b16 %v92
    %v660 = vunpack.c.l.b16 %v93
    %v661 = vunpack.c.l.b16 %v94
    %v662 = vunpack.c.l.b16 %v95
    %v663 = vunpack.c.l.b16 %v96
    %v664 = vunpack.c.l.b16 %v97
    %v665 = vunpack.c.l.b16 %v98
    %v666 = vunpack.c.l.b16 %v99
    %v667 = vunpack.c.l.b16 %v100
    %v668 = vunpack.c.l.b16 %v101
    %v669 = vunpack.c.l.b16 %v102
    %v670 = vunpack.c.l.b16 %v103
    %v671 = vunpack.c.l.b16 %v104
    %v672 = vunpack.c.l.b16 %v105
    %v673 = vunpack.c.l.b16 %v106
    %v674 = vunpack.c.l.b16 %v107
    %v675 = vunpack.c.l.b16 %v108
    %v676 = vunpack.c.l.b16 %v109
    %v677 = vunpack.c.l.b16 %v110
    %v678 = vunpack.c.l.b16 %v111
    %v679 = vunpack.c.l.b16 %v112
    %v680 = vunpack.c.l.b16 %v113
    %v681 = vunpack.c.l.b16 %v114
    %v682 = vunpack.c.l.b16 %v115
    %v683 = vunpack.c.l.b16 %v116
    %v684 = vunpack.c.l.b16 %v117
    %v685 = vunpack.c.l.b16 %v118
    %v686 = vunpack.c.l.b16 %v119
    %v687 = vunpack.c.l.b16 %v120
    %v688 = vunpack.c.l.b16 %v121
    %v689 = vunpack.c.l.b16 %v122
    %v690 = vunpack.c.l.b16 %v123
    %v691 = vunpack.c.l.b16 %v124
    %v692 = vunpack.c.l.b16 %v125
    %v693 = vunpack.c.l.b16 %v126
    %v694 = vunpack.c.l.b16 %v127
    %v695 = vunpack.c.l.b16 %v128
    %v696 = vunpack.c.l.b16 %v129
    %v697 = vunpack.c.l.b16 %v130
    %v698 = vunpack.c.l.b16 %v131
    %v699 = vunpack.c.l.b16 %v132
    %v700 = vunpack.c.l.b16 %v133
    %v701 = vunpack.c.l.b16 %v134
    %v702 = vunpack.c.l.b16 %v135
    %v703 = vunpack.c.l.b16 %v136
    %v704 = vunpack.c.l.b16 %v137
    %v705 = vunpack.c.l.b16 %v138
    %v706 = vunpack.c.l.b16 %v139
    %v707 = vunpack.c.l.b16 %v140
    %v708 = vunpack.c.l.b16 %v141
    %v709 = vunpack.c.l.b16 %v142
    %v710 = vunpack.c.l.b16 %v143
    %v711 = vunpack.c.l.b16 %v144
    %v712 = vunpack.c.l.b16 %v145
    %v713 = vunpack.c.l.b16 %v146
    %v714 = vunpack.c.l.b16 %v147
    %v715 = vunpack.c.l.b16 %v148
    %v716 = vunpack.c.l.b16 %v149
    %v717 = vunpack.c.l.b16 %v150
    %v718 = vunpack.c.l.b16 %v151
    %v719 = vunpack.c.l.b16 %v152
    %v720 = vunpack.c.l.b16 %v153
    %v721 = vunpack.c.l.b16 %v154
    %v722 = vunpack.c.l.b16 %v155
    %v723 = vunpack.c.l.b16 %v156
    %v724 = vunpack.c.l.b16 %v157
    %v725 = vunpack.c.l.b16 %v158
    %v726 = vunpack.c.l.b16 %v159
    %v727 = vunpack.c.l.b16 %v160
    %v728 = vunpack.c.l.b16 %v161
    %v729 = vunpack.c.l.b16 %v162
    %v730 = vunpack.c.l.b16 %v163
    %v731 = vunpack.c.l.b16 %v164
    %v732 = vunpack.c.l.b16 %v165
    %v733 = vunpack.c.l.b16 %v166
    %v734 = vunpack.c.l.b16 %v167
    %v735 = vunpack.c.l.b16 %v168
    %v736 = vunpack.c.l.b16 %v169
    %v737 = vunpack.c.l.b16 %v170
    %v738 = vunpack.c.l.b16 %v171
    %v739 = vunpack.c.l.b16 %v172
    %v740 = vunpack.c.l.b16 %v173
    %v741 = vunpack.c.l.b16 %v174
    %v742 = vunpack.c.l.b16 %v175
    %v743 = vunpack.c.l.b16 %v176
    %v744 = vunpack.c.l.b16 %v177
    %v745 = vunpack.c.l.b16 %v178
    %v746 = vunpack.c.l.b16 %v179
    %v747 = vunpack.c.l.b16 %v180
    %v748 = vunpack.c.l.b16 %v181
    %v749 = vunpack.c.l.b16 %v182
    %v750 = vunpack.c.l.b16 %v183
    %v751 = vunpack.c.l.b16 %v184
    %v752 = vunpack.c.l.b16 %v185
    %v753 = vunpack.c.l.b16 %v186
    %v754 = vunpack.c.l.b16 %v187
    %v755 = vunpack.c.l.b16 %v188
    %v756 = vunpack.c.l.b16 %v189
    %v757 = vunpack.c.l.b16 %v190
    %v758 = vunpack.c.l.b16 %v191
    %v759 = vunpack.c.l.b16 %v192
    %v760 = vunpack.c.l.b16 %v193
    %v761 = vunpack.c.l.b16 %v194
    %v762 = vunpack.c.l.b16 %v195
    %v763 = vunpack.c.l.b16 %v196
    %v764 = vunpack.c.l.b16 %v197
    %v765 = vunpack.c.l.b16 %v198
    %v766 = vunpack.c.l.b16 %v199
    %v767 = vunpack.c.l.b16 %v200
    %v768 = vunpack.c.l.b16 %v201
    %v769 = vunpack.c.l.b16 %v202
    %v770 = vunpack.c.l.b16 %v203
    %v771 = vunpack.c.l.b16 %v204
    %v772 = vunpack.c.l.b16 %v205
    %v773 = vunpack.c.l.b16 %v206
    %v774 = vunpack.c.l.b16 %v207
    %v775 = vunpack.c.l.b16 %v208
    %v776 = vunpack.c.l.b16 %v209
    %v777 = vunpack.c.l.b16 %v210
    %v778 = vunpack.c.l.b16 %v211
    %v779 = vunpack.c.l.b16 %v212
    %v780 = vunpack.c.l.b16 %v213
    %v781 = vunpack.c.l.b16 %v214
    %v782 = vunpack.c.l.b16 %v215
    %v783 = vunpack.c.l.b16 %v216
    %v784 = vunpack.c.l.b16 %v217
    %v785 = vunpack.c.l.b16 %v218
    %v786 = vunpack.c.l.b16 %v219
    %v787 = vunpack.c.l.b16 %v220
    %v788 = vunpack.c.l.b16 %v221
    %v789 = vunpack.c.l.b16 %v222
    %v790 = vunpack.c.l.b16 %v223
    %v791 = vunpack.c.l.b16 %v224
    %v792 = vunpack.c.l.b16 %v225
    %v793 = vunpack.c.l.b16 %v226
    %v794 = vunpack.c.l.b16 %v227
    %v795 = vunpack.c.l.b16 %v228
    %v796 = vunpack.c.l.b16 %v229
    %v797 = vunpack.c.l.b16 %v230
    %v798 = vunpack.c.l.b16 %v231
    %v799 = vunpack.c.l.b16 %v232
    %v800 = vunpack.c.l.b16 %v233
    %v801 = vunpack.c.l.b16 %v234
    %v802 = vunpack.c.l.b16 %v235
    %v803 = vunpack.c.l.b16 %v236
    %v804 = vunpack.c.l.b16 %v237
    %v805 = vunpack.c.l.b16 %v238
    %v806 = vunpack.c.l.b16 %v239
    %v807 = vunpack.c.l.b16 %v240
    %v808 = vunpack.c.l.b16 %v241
    %v809 = vunpack.c.l.b16 %v242
    %v810 = vunpack.c.l.b16 %v243
    %v811 = vunpack.c.l.b16 %v244
    %v812 = vunpack.c.l.b16 %v245
    %v813 = vunpack.c.l.b16 %v246
    %v814 = vunpack.c.l.b16 %v247
    %v815 = vunpack.c.l.b16 %v248
    %v816 = vunpack.c.l.b16 %v249
    %v817 = vunpack.c.l.b16 %v250
    %v818 = vunpack.c.l.b16 %v251
    %v819 = vunpack.c.l.b16 %v252
    %v820 = vunpack.c.l.b16 %v253
    %v821 = vunpack.c.l.b16 %v254
    %v822 = vunpack.c.l.b16 %v255
    %v823 = vpack.c.b16 %v600, %v599
    %v824 = vpack.c.b16 %v602, %v601
    %v825 = vpack.c.b16 %v604, %v603
    %v826 = vpack.c.b16 %v606, %v605
    %v827 = vpack.c.b16 %v608, %v607
    %v828 = vpack.c.b16 %v610, %v609
    %v829 = vpack.c.b16 %v612, %v611
    %v830 = vpack.c.b16 %v614, %v613
    %v831 = vpack.c.b16 %v616, %v615
    %v832 = vpack.c.b16 %v618, %v617
    %v833 = vpack.c.b16 %v620, %v619
    %v834 = vpack.c.b16 %v622, %v621
    %v835 = vpack.c.b16 %v624, %v623
    %v836 = vpack.c.b16 %v626, %v625
    %v837 = vpack.c.b16 %v628, %v627
    %v838 = vpack.c.b16 %v630, %v629
    %v839 = vpack.c.b16 %v632, %v631
    %v840 = vpack.c.b16 %v634, %v633
    %v841 = vpack.c.b16 %v636, %v635
    %v842 = vpack.c.b16 %v638, %v637
    %v843 = vpack.c.b16 %v640, %v639
    %v844 = vpack.c.b16 %v642, %v641
    %v845 = vpack.c.b16 %v644, %v643
    %v846 = vpack.c.b16 %v646, %v645
    %v847 = vpack.c.b16 %v648, %v647
    %v848 = vpack.c.b16 %v650, %v649
    %v849 = vpack.c.b16 %v652, %v651
    %v850 = vpack.c.b16 %v654, %v653
    %v851 = vpack.c.b16 %v656, %v655
    %v852 = vpack.c.b16 %v658, %v657
    %v853 = vpack.c.b16 %v660, %v659
    %v854 = vpack.c.b16 %v662, %v661
    %v855 = vpack.c.b16 %v664, %v663
    %v856 = vpack.c.b16 %v666, %v665
    %v857 = vpack.c.b16 %v668, %v667
    %v858 = vpack.c.b16 %v670, %v669
    %v859 = vpack.c.b16 %v672, %v671
    %v860 = vpack.c.b16 %v674, %v673
    %v861 = vpack.c.b16 %v676, %v675
    %v862 = vpack.c.b16 %v678, %v677
    %v863 = vpack.c.b16 %v680, %v679
    %v864 = vpack.c.b16 %v682, %v681
    %v865 = vpack.c.b16 %v684, %v683
    %v866 = vpack.c.b16 %v686, %v685
    %v867 = vpack.c.b16 %v688, %v687
    %v868 = vpack.c.b16 %v690, %v689
    %v869 = vpack.c.b16 %v692, %v691
    %v870 = vpack.c.b16 %v694, %v693
    %v871 = vpack.c.b16 %v696, %v695
    %v872 = vpack.c.b16 %v698, %v697
    %v873 = vpack.c.b16 %v700, %v699
    %v874 = vpack.c.b16 %v702, %v701
    %v875 = vpack.c.b16 %v704, %v703
    %v876 = vpack.c.b16 %v706, %v705
    %v877 = vpack.c.b16 %v708, %v707
    %v878 = vpack.c.b16 %v710, %v709
    %v879 = vpack.c.b16 %v712, %v711
    %v880 = vpack.c.b16 %v714, %v713
    %v881 = vpack.c.b16 %v716, %v715
    %v882 = vpack.c.b16 %v718, %v717
    %v883 = vpack.c.b16 %v720, %v719
    %v884 = vpack.c.b16 %v722, %v721
    %v885 = vpack.c.b16 %v724, %v723
    %v886 = vpack.c.b16 %v726, %v725
    %v887 = vpack.c.b16 %v728, %v727
    %v888 = vpack.c.b16 %v730, %v729
    %v889 = vpack.c.b16 %v732, %v731
    %v890 = vpack.c.b16 %v734, %v733
    %v891 = vpack.c.b16 %v736, %v735
    %v892 = vpack.c.b16 %v738, %v737
    %v893 = vpack.c.b16 %v740, %v739
    %v894 = vpack.c.b16 %v742, %v741
    %v895 = vpack.c.b16 %v744, %v743
    %v896 = vpack.c.b16 %v746, %v745
    %v897 = vpack.c.b16 %v748, %v747
    %v898 = vpack.c.b16 %v750, %v749
    %v899 = vpack.c.b16 %v752, %v751
    %v900 = vpack.c.b16 %v754, %v753
    %v901 = vpack.c.b16 %v756, %v755
    %v902 = vpack.c.b16 %v758, %v757
    %v903 = vpack.c.b16 %v760, %v759
    %v904 = vpack.c.b16 %v762, %v761
    %v905 = vpack.c.b16 %v764, %v763
    %v906 = vpack.c.b16 %v766, %v765
    %v907 = vpack.c.b16 %v768, %v767
    %v908 = vpack.c.b16 %v770, %v769
    %v909 = vpack.c.b16 %v772, %v771
    %v910 = vpack.c.b16 %v774, %v773
    %v911 = vpack.c.b16 %v776, %v775
    %v912 = vpack.c.b16 %v778, %v777
    %v913 = vpack.c.b16 %v780, %v779
    %v914 = vpack.c.b16 %v782, %v781
    %v915 = vpack.c.b16 %v784, %v783
    %v916 = vpack.c.b16 %v786, %v785
    %v917 = vpack.c.b16 %v788, %v787
    %v918 = vpack.c.b16 %v790, %v789
    %v919 = vpack.c.b16 %v792, %v791
    %v920 = vpack.c.b16 %v794, %v793
    %v921 = vpack.c.b16 %v796, %v795
    %v922 = vpack.c.b16 %v798, %v797
    %v923 = vpack.c.b16 %v800, %v799
    %v924 = vpack.c.b16 %v802, %v801
    %v925 = vpack.c.b16 %v804, %v803
    %v926 = vpack.c.b16 %v806, %v805
    %v927 = vpack.c.b16 %v808, %v807
    %v928 = vpack.c.b16 %v810, %v809
    %v929 = vpack.c.b16 %v812, %v811
    %v930 = vpack.c.b16 %v814, %v813
    %v931 = vpack.c.b16 %v816, %v815
    %v932 = vpack.c.b16 %v818, %v817
    %v933 = vpack.c.b16 %v820, %v819
    %v934 = vpack.c.b16 %v822, %v821
    %1047 = vmatprep.subr.bf16.mxu0 0
    %1048 = vmatpush1.bf16.msra.mxu0 %v823
    %1049 = vmatprep.subr.bf16.mxu0 0
    %1050 = vmatpush1.bf16.msra.mxu0 %v824
    %1051 = vmatprep.subr.bf16.mxu0 0
    %1052 = vmatpush1.bf16.msra.mxu0 %v825
    %1053 = vmatprep.subr.bf16.mxu0 0
    %1054 = vmatpush1.bf16.msra.mxu0 %v826
    %1055 = vmatprep.subr.bf16.mxu0 0
    %1056 = vmatpush1.bf16.msra.mxu0 %v827
    %1057 = vmatprep.subr.bf16.mxu0 0
    %1058 = vmatpush1.bf16.msra.mxu0 %v828
    %1059 = vmatprep.subr.bf16.mxu0 0
    %1060 = vmatpush1.bf16.msra.mxu0 %v829
    %1061 = vmatprep.subr.bf16.mxu0 0
    %1062 = vmatpush1.bf16.msra.mxu0 %v830
    %1063 = vmatprep.subr.bf16.mxu0 0
    %1064 = vmatpush1.bf16.msra.mxu0 %v831
    %1065 = vmatprep.subr.bf16.mxu0 0
    %1066 = vmatpush1.bf16.msra.mxu0 %v832
    %1067 = vmatprep.subr.bf16.mxu0 0
    %1068 = vmatpush1.bf16.msra.mxu0 %v833
    %1069 = vmatprep.subr.bf16.mxu0 0
    %1070 = vmatpush1.bf16.msra.mxu0 %v834
    %1071 = vmatprep.subr.bf16.mxu0 0
    %1072 = vmatpush1.bf16.msra.mxu0 %v835
    %1073 = vmatprep.subr.bf16.mxu0 0
    %1074 = vmatpush1.bf16.msra.mxu0 %v836
    %1075 = vmatprep.subr.bf16.mxu0 0
    %1076 = vmatpush1.bf16.msra.mxu0 %v837
    %1077 = vmatprep.subr.bf16.mxu0 0
    %1078 = vmatpush1.bf16.msra.mxu0 %v838
    %1079 = vmatprep.mubr.bf16.mxu0 %v302
    %1080 = vmatmul.mubr.bf16.gmra.mrb[0].mxu0 %v288
    %v1081 = vpop.f32.mrb[0].mxu0
    %v1082 = vadd.f32 %v261, %v1081
    %v1083 = vpop.f32.mrb[0].mxu0
    %v1084 = vpop.f32.mrb[0].mxu0
    %v1085 = vpop.f32.mrb[0].mxu0
    %1086 = vdwg.mxu0
    %1087 = vmatprep.subr.bf16.mxu0 0
    %1088 = vmatpush1.bf16.msra.mxu0 %v839
    %1089 = vmatprep.subr.bf16.mxu0 0
    %1090 = vmatpush1.bf16.msra.mxu0 %v840
    %1091 = vmatprep.subr.bf16.mxu0 0
    %1092 = vmatpush1.bf16.msra.mxu0 %v841
    %1093 = vmatprep.subr.bf16.mxu0 0
    %1094 = vmatpush1.bf16.msra.mxu0 %v842
    %1095 = vmatprep.subr.bf16.mxu0 0
    %1096 = vmatpush1.bf16.msra.mxu0 %v843
    %1097 = vmatprep.subr.bf16.mxu0 0
    %1098 = vmatpush1.bf16.msra.mxu0 %v844
    %1099 = vmatprep.subr.bf16.mxu0 0
    %1100 = vmatpush1.bf16.msra.mxu0 %v845
    %1101 = vmatprep.subr.bf16.mxu0 0
    %1102 = vmatpush1.bf16.msra.mxu0 %v846
    %1103 = vmatprep.subr.bf16.mxu0 0
    %1104 = vmatpush1.bf16.msra.mxu0 %v847
    %1105 = vmatprep.subr.bf16.mxu0 0
    %1106 = vmatpush1.bf16.msra.mxu0 %v848
    %1107 = vmatprep.subr.bf16.mxu0 0
    %1108 = vmatpush1.bf16.msra.mxu0 %v849
    %1109 = vmatprep.subr.bf16.mxu0 0
    %1110 = vmatpush1.bf16.msra.mxu0 %v850
    %1111 = vmatprep.subr.bf16.mxu0 0
    %1112 = vmatpush1.bf16.msra.mxu0 %v851
    %1113 = vmatprep.subr.bf16.mxu0 0
    %1114 = vmatpush1.bf16.msra.mxu0 %v852
    %1115 = vmatprep.subr.bf16.mxu0 0
    %1116 = vmatpush1.bf16.msra.mxu0 %v853
    %1117 = vmatprep.subr.bf16.mxu0 0
    %1118 = vmatpush1.bf16.msra.mxu0 %v854
    %1119 = vmatprep.mubr.bf16.mxu0 %v312
    %1120 = vmatmul.mubr.bf16.gmra.mrb[0].mxu0 %v310
    %v1121 = vpop.f32.mrb[0].mxu0
    %v1122 = vadd.f32 %v1082, %v1121
    %v1123 = vpop.f32.mrb[0].mxu0
    %v1124 = vpop.f32.mrb[0].mxu0
    %v1125 = vpop.f32.mrb[0].mxu0
    %1126 = vdwg.mxu0
    %1127 = vmatprep.subr.bf16.mxu0 0
    %1128 = vmatpush1.bf16.msra.mxu0 %v855
    %1129 = vmatprep.subr.bf16.mxu0 0
    %1130 = vmatpush1.bf16.msra.mxu0 %v856
    %1131 = vmatprep.subr.bf16.mxu0 0
    %1132 = vmatpush1.bf16.msra.mxu0 %v857
    %1133 = vmatprep.subr.bf16.mxu0 0
    %1134 = vmatpush1.bf16.msra.mxu0 %v858
    %1135 = vmatprep.subr.bf16.mxu0 0
    %1136 = vmatpush1.bf16.msra.mxu0 %v859
    %1137 = vmatprep.subr.bf16.mxu0 0
    %1138 = vmatpush1.bf16.msra.mxu0 %v860
    %1139 = vmatprep.subr.bf16.mxu0 0
    %1140 = vmatpush1.bf16.msra.mxu0 %v861
    %1141 = vmatprep.subr.bf16.mxu0 0
    %1142 = vmatpush1.bf16.msra.mxu0 %v862
    %1143 = vmatprep.subr.bf16.mxu0 0
    %1144 = vmatpush1.bf16.msra.mxu0 %v863
    %1145 = vmatprep.subr.bf16.mxu0 0
    %1146 = vmatpush1.bf16.msra.mxu0 %v864
    %1147 = vmatprep.subr.bf16.mxu0 0
    %1148 = vmatpush1.bf16.msra.mxu0 %v865
    %1149 = vmatprep.subr.bf16.mxu0 0
    %1150 = vmatpush1.bf16.msra.mxu0 %v866
    %1151 = vmatprep.subr.bf16.mxu0 0
    %1152 = vmatpush1.bf16.msra.mxu0 %v867
    %1153 = vmatprep.subr.bf16.mxu0 0
    %1154 = vmatpush1.bf16.msra.mxu0 %v868
    %1155 = vmatprep.subr.bf16.mxu0 0
    %1156 = vmatpush1.bf16.msra.mxu0 %v869
    %1157 = vmatprep.subr.bf16.mxu0 0
    %1158 = vmatpush1.bf16.msra.mxu0 %v870
    %1159 = vmatprep.mubr.bf16.mxu0 %v309
    %1160 = vmatmul.mubr.bf16.gmra.mrb[0].mxu0 %v295
    %v1161 = vpop.f32.mrb[0].mxu0
    %v1162 = vadd.f32 %v1122, %v1161
    %v1163 = vpop.f32.mrb[0].mxu0
    %v1164 = vpop.f32.mrb[0].mxu0
    %v1165 = vpop.f32.mrb[0].mxu0
    %1166 = vdwg.mxu0
    %1167 = vmatprep.subr.bf16.mxu0 0
    %1168 = vmatpush1.bf16.msra.mxu0 %v871
    %1169 = vmatprep.subr.bf16.mxu0 0
    %1170 = vmatpush1.bf16.msra.mxu0 %v872
    %1171 = vmatprep.subr.bf16.mxu0 0
    %1172 = vmatpush1.bf16.msra.mxu0 %v873
    %1173 = vmatprep.subr.bf16.mxu0 0
    %1174 = vmatpush1.bf16.msra.mxu0 %v874
    %1175 = vmatprep.subr.bf16.mxu0 0
    %1176 = vmatpush1.bf16.msra.mxu0 %v875
    %1177 = vmatprep.subr.bf16.mxu0 0
    %1178 = vmatpush1.bf16.msra.mxu0 %v876
    %1179 = vmatprep.subr.bf16.mxu0 0
    %1180 = vmatpush1.bf16.msra.mxu0 %v877
    %1181 = vmatprep.subr.bf16.mxu0 0
    %1182 = vmatpush1.bf16.msra.mxu0 %v878
    %1183 = vmatprep.subr.bf16.mxu0 0
    %1184 = vmatpush1.bf16.msra.mxu0 %v879
    %1185 = vmatprep.subr.bf16.mxu0 0
    %1186 = vmatpush1.bf16.msra.mxu0 %v880
    %1187 = vmatprep.subr.bf16.mxu0 0
    %1188 = vmatpush1.bf16.msra.mxu0 %v881
    %1189 = vmatprep.subr.bf16.mxu0 0
    %1190 = vmatpush1.bf16.msra.mxu0 %v882
    %1191 = vmatprep.subr.bf16.mxu0 0
    %1192 = vmatpush1.bf16.msra.mxu0 %v883
    %1193 = vmatprep.subr.bf16.mxu0 0
    %1194 = vmatpush1.bf16.msra.mxu0 %v884
    %1195 = vmatprep.subr.bf16.mxu0 0
    %1196 = vmatpush1.bf16.msra.mxu0 %v885
    %1197 = vmatprep.subr.bf16.mxu0 0
    %1198 = vmatpush1.bf16.msra.mxu0 %v886
    %1199 = vmatprep.mubr.bf16.mxu0 %v313
    %1200 = vmatmul.mubr.bf16.gmra.mrb[0].mxu0 %v311
    %v1201 = vpop.f32.mrb[0].mxu0
    %v1202 = vadd.f32 %v1162, %v1201
    %v1203 = vpop.f32.mrb[0].mxu0
    %v1204 = vpop.f32.mrb[0].mxu0
    %v1205 = vpop.f32.mrb[0].mxu0
    %1206 = vdwg.mxu0
    %1207 = vmatprep.subr.bf16.mxu0 0
    %1208 = vmatpush1.bf16.msra.mxu0 %v887
    %1209 = vmatprep.subr.bf16.mxu0 0
    %1210 = vmatpush1.bf16.msra.mxu0 %v888
    %1211 = vmatprep.subr.bf16.mxu0 0
    %1212 = vmatpush1.bf16.msra.mxu0 %v889
    %1213 = vmatprep.subr.bf16.mxu0 0
    %1214 = vmatpush1.bf16.msra.mxu0 %v890
    %1215 = vmatprep.subr.bf16.mxu0 0
    %1216 = vmatpush1.bf16.msra.mxu0 %v891
    %1217 = vmatprep.subr.bf16.mxu0 0
    %1218 = vmatpush1.bf16.msra.mxu0 %v892
    %1219 = vmatprep.subr.bf16.mxu0 0
    %1220 = vmatpush1.bf16.msra.mxu0 %v893
    %1221 = vmatprep.subr.bf16.mxu0 0
    %1222 = vmatpush1.bf16.msra.mxu0 %v894
    %1223 = vmatprep.subr.bf16.mxu0 0
    %1224 = vmatpush1.bf16.msra.mxu0 %v895
    %1225 = vmatprep.subr.bf16.mxu0 0
    %1226 = vmatpush1.bf16.msra.mxu0 %v896
    %1227 = vmatprep.subr.bf16.mxu0 0
    %1228 = vmatpush1.bf16.msra.mxu0 %v897
    %1229 = vmatprep.subr.bf16.mxu0 0
    %1230 = vmatpush1.bf16.msra.mxu0 %v898
    %1231 = vmatprep.subr.bf16.mxu0 0
    %1232 = vmatpush1.bf16.msra.mxu0 %v899
    %1233 = vmatprep.subr.bf16.mxu0 0
    %1234 = vmatpush1.bf16.msra.mxu0 %v900
    %1235 = vmatprep.subr.bf16.mxu0 0
    %1236 = vmatpush1.bf16.msra.mxu0 %v901
    %1237 = vmatprep.subr.bf16.mxu0 0
    %1238 = vmatpush1.bf16.msra.mxu0 %v902
    %1239 = vmatprep.mubr.bf16.mxu0 %v351
    %1240 = vmatmul.mubr.bf16.gmra.mrb[0].mxu0 %v337
    %v1241 = vpop.f32.mrb[0].mxu0
    %v1242 = vadd.f32 %v1202, %v1241
    %v1243 = vpop.f32.mrb[0].mxu0
    %v1244 = vpop.f32.mrb[0].mxu0
    %v1245 = vpop.f32.mrb[0].mxu0
    %1246 = vdwg.mxu0
    %1247 = vmatprep.subr.bf16.mxu0 0
    %1248 = vmatpush1.bf16.msra.mxu0 %v903
    %1249 = vmatprep.subr.bf16.mxu0 0
    %1250 = vmatpush1.bf16.msra.mxu0 %v904
    %1251 = vmatprep.subr.bf16.mxu0 0
    %1252 = vmatpush1.bf16.msra.mxu0 %v905
    %1253 = vmatprep.subr.bf16.mxu0 0
    %1254 = vmatpush1.bf16.msra.mxu0 %v906
    %1255 = vmatprep.subr.bf16.mxu0 0
    %1256 = vmatpush1.bf16.msra.mxu0 %v907
    %1257 = vmatprep.subr.bf16.mxu0 0
    %1258 = vmatpush1.bf16.msra.mxu0 %v908
    %1259 = vmatprep.subr.bf16.mxu0 0
    %1260 = vmatpush1.bf16.msra.mxu0 %v909
    %1261 = vmatprep.subr.bf16.mxu0 0
    %1262 = vmatpush1.bf16.msra.mxu0 %v910
    %1263 = vmatprep.subr.bf16.mxu0 0
    %1264 = vmatpush1.bf16.msra.mxu0 %v911
    %1265 = vmatprep.subr.bf16.mxu0 0
    %1266 = vmatpush1.bf16.msra.mxu0 %v912
    %1267 = vmatprep.subr.bf16.mxu0 0
    %1268 = vmatpush1.bf16.msra.mxu0 %v913
    %1269 = vmatprep.subr.bf16.mxu0 0
    %1270 = vmatpush1.bf16.msra.mxu0 %v914
    %1271 = vmatprep.subr.bf16.mxu0 0
    %1272 = vmatpush1.bf16.msra.mxu0 %v915
    %1273 = vmatprep.subr.bf16.mxu0 0
    %1274 = vmatpush1.bf16.msra.mxu0 %v916
    %1275 = vmatprep.subr.bf16.mxu0 0
    %1276 = vmatpush1.bf16.msra.mxu0 %v917
    %1277 = vmatprep.subr.bf16.mxu0 0
    %1278 = vmatpush1.bf16.msra.mxu0 %v918
    %1279 = vmatprep.mubr.bf16.mxu0 %v360
    %1280 = vmatmul.mubr.bf16.gmra.mrb[0].mxu0 %v359
    %v1281 = vpop.f32.mrb[0].mxu0
    %v1282 = vadd.f32 %v1242, %v1281
    %v1283 = vpop.f32.mrb[0].mxu0
    %v1284 = vpop.f32.mrb[0].mxu0
    %v1285 = vpop.f32.mrb[0].mxu0
    %1286 = vdwg.mxu0
    %1287 = vmatprep.subr.bf16.mxu0 0
    %1288 = vmatpush1.bf16.msra.mxu0 %v919
    %1289 = vmatprep.subr.bf16.mxu0 0
    %1290 = vmatpush1.bf16.msra.mxu0 %v920
    %1291 = vmatprep.subr.bf16.mxu0 0
    %1292 = vmatpush1.bf16.msra.mxu0 %v921
    %1293 = vmatprep.subr.bf16.mxu0 0
    %1294 = vmatpush1.bf16.msra.mxu0 %v922
    %1295 = vmatprep.subr.bf16.mxu0 0
    %1296 = vmatpush1.bf16.msra.mxu0 %v923
    %1297 = vmatprep.subr.bf16.mxu0 0
    %1298 = vmatpush1.bf16.msra.mxu0 %v924
    %1299 = vmatprep.subr.bf16.mxu0 0
    %1300 = vmatpush1.bf16.msra.mxu0 %v925
    %1301 = vmatprep.subr.bf16.mxu0 0
    %1302 = vmatpush1.bf16.msra.mxu0 %v926
    %1303 = vmatprep.subr.bf16.mxu0 0
    %1304 = vmatpush1.bf16.msra.mxu0 %v927
    %1305 = vmatprep.subr.bf16.mxu0 0
    %1306 = vmatpush1.bf16.msra.mxu0 %v928
    %1307 = vmatprep.subr.bf16.mxu0 0
    %1308 = vmatpush1.bf16.msra.mxu0 %v929
    %1309 = vmatprep.subr.bf16.mxu0 0
    %1310 = vmatpush1.bf16.msra.mxu0 %v930
    %1311 = vmatprep.subr.bf16.mxu0 0
    %1312 = vmatpush1.bf16.msra.mxu0 %v931
    %1313 = vmatprep.subr.bf16.mxu0 0
    %1314 = vmatpush1.bf16.msra.mxu0 %v932
    %1315 = vmatprep.subr.bf16.mxu0 0
    %1316 = vmatpush1.bf16.msra.mxu0 %v933
    %1317 = vmatprep.subr.bf16.mxu0 0
    %1318 = vmatpush1.bf16.msra.mxu0 %v934
    %1319 = vmatprep.mubr.bf16.mxu0 %v358
    %1320 = vmatmul.mubr.bf16.gmra.mrb[0].mxu0 %v344
    %v1321 = vpop.f32.mrb[0].mxu0
    %v1322 = vadd.f32 %v1282, %v1321
    %v1323 = vpop.f32.mrb[0].mxu0
    %v1324 = vpop.f32.mrb[0].mxu0
    %v1325 = vpop.f32.mrb[0].mxu0
    %1326 = vdwg.mxu0
    %1327 = vst [vmem:[#allocation5] sm:$0x3] %v1322
    // Predicated region
    $region18: #{classifier_forward.1} parent=1 // pred_check
      _
    $region19: #{classifier_forward.1} parent=1 // pred_check_branch
      %1329 = sbr.rel (0) target = $region21
    $region20: #{classifier_forward.1} parent=1 // pred_region
      %s1331 = ssub.s32 32, 32
      %1332 = vsyncadd [#allocation4], %s1331
      %s1334 = sshll.u32 [#allocation5], 4
      %s1335 = int_to_ptr.vmem [resolvable:$true] %s1334
      %1337 = dma.vmem_to_hbm [thread:$0]  %s1335, 32, %s3, [#allocation4]
    $region21: #{classifier_forward.1} parent=1 // pred_fallthru
      _
    // Predicated region
    $region22: #{classifier_forward.1} parent=1 // pred_check
      _
    $region23: #{classifier_forward.1} parent=1 // pred_check_branch
      %1339 = sbr.rel (0) target = $region25
    $region24: #{classifier_forward.1} parent=1 // pred_region
      %1340 = dma.done [#allocation4], 32
    $region25: #{classifier_forward.1} parent=1 // pred_fallthru
      _
    %1341 = vsyncpa [#allocation3], 1
    %1342 = vsyncpa [#allocation4], 1

</llo_original>
